<compile_context>
chip_gen: v7x
topology: tpu7x:2x2x1
jax: 0.10.0
libtpu: 0.0.40
codegen_flags: <defaults>
</compile_context>

<pallas_src>
import jax
import jax.numpy as jnp
from jax.experimental import pallas as pl
from jax.experimental.pallas import tpu as pltpu

_LANE = 128                      # TPU vreg lane width
_SMALL_BYTES = 2 * 1024 * 1024   # below this: single ungridded block


def _scale_kernel(scale_ref, x_ref, o_ref):
    # scale_ref: (1, 1) f32 scalar in SMEM; x_ref / o_ref: lane-dense VMEM tiles.
    s = scale_ref[0, 0]
    o_ref[...] = (x_ref[...].astype(jnp.float32) * s).astype(o_ref.dtype)


def _tpu_block_params():
    """Generation-aware (target_block_bytes, vmem_limit_bytes)."""
    try:
        vmem_cap = int(pltpu.get_tpu_info().vmem_capacity_bytes)
    except Exception:  # pragma: no cover - conservative fallback
        vmem_cap = 64 * 1024 * 1024
    if vmem_cap >= 100 * 1024 * 1024:
        # v5e / v6e: 128 MiB physical VMEM -> big 8 MiB blocks, raised scoped limit.
        return 8 * 1024 * 1024, 64 * 1024 * 1024
    # v7x: 64 MiB per TC -> 4 MiB blocks (~16 MiB resident double-buffered in+out).
    return 4 * 1024 * 1024, 32 * 1024 * 1024


def _choose_block_rows(rows: int, itemsize: int, block_bytes: int) -> int:
    """Largest tile-aligned row block <= rows targeting ~block_bytes per block."""
    target = max(32, block_bytes // (_LANE * itemsize))
    block_rows = min(target, rows)
    # Multiple of 32 so the block is tile-aligned for f32/bf16/int8/fp8 alike.
    block_rows = max(32, (block_rows // 32) * 32)
    return block_rows


def scale_forward(x: jax.Array, scale: jax.Array, *,
                  grid_threshold_bytes: int = _SMALL_BYTES,
                  block_rows: int | None = None) -> jax.Array:
    """y = x * scale, where scale is a shape-(1,) f32 parameter (nn.Parameter)."""
    orig_shape = x.shape
    total = int(x.size)
    # PyTorch promotion: input * float32 Parameter -> promoted dtype (f32 stays f32).
    out_dtype = jnp.result_type(x.dtype, jnp.float32)
    in_item = jnp.dtype(x.dtype).itemsize
    out_item = jnp.dtype(out_dtype).itemsize
    scale_smem = jnp.asarray(scale, dtype=jnp.float32).reshape(1, 1)

    flat = x.reshape(-1)
    rem = total % _LANE
    if rem:
        # Rare path: pad only the <128-element lane remainder (keeps lane density).
        flat = jnp.pad(flat, (0, _LANE - rem))
    rows = flat.size // _LANE
    x2d = flat.reshape(rows, _LANE)

    if total * max(in_item, out_item) <= grid_threshold_bytes:
        # Small tensor: one program, whole array as a single VMEM block (no grid).
        y2d = pl.pallas_call(
            _scale_kernel,
            out_shape=jax.ShapeDtypeStruct((rows, _LANE), out_dtype),
            in_specs=[
                pl.BlockSpec(memory_space=pltpu.SMEM),   # scalar parameter
                pl.BlockSpec(memory_space=pltpu.VMEM),   # whole array, one block
            ],
            out_specs=pl.BlockSpec(memory_space=pltpu.VMEM),
        )(scale_smem, x2d)
    else:
        block_bytes, vmem_limit = _tpu_block_params()
        if block_rows is None:
            block_rows = _choose_block_rows(rows, max(in_item, out_item), block_bytes)
        grid = (pl.cdiv(rows, block_rows),)   # ragged last block handled by Pallas
        # x2d is a fresh reshape intermediate -> safe to donate when dtypes match.
        alias = {1: 0} if out_dtype == x.dtype else {}
        y2d = pl.pallas_call(
            _scale_kernel,
            out_shape=jax.ShapeDtypeStruct((rows, _LANE), out_dtype),
            grid=grid,
            in_specs=[
                pl.BlockSpec(memory_space=pltpu.SMEM),                 # scalar parameter
                pl.BlockSpec((block_rows, _LANE), lambda i: (i, 0)),
            ],
            out_specs=pl.BlockSpec((block_rows, _LANE), lambda i: (i, 0)),
            compiler_params=pltpu.CompilerParams(
                dimension_semantics=("parallel",),
                vmem_limit_bytes=vmem_limit,
            ),
            cost_estimate=pl.CostEstimate(
                flops=total,
                transcendentals=0,
                bytes_accessed=total * (in_item + out_item),
            ),
            input_output_aliases=alias,
        )(scale_smem, x2d)

    if rem:
        return y2d.reshape(-1)[:total].reshape(orig_shape)
    return y2d.reshape(orig_shape)


if __name__ == "__main__":
    key = jax.random.PRNGKey(0)

    # Parameter init matching nn.Parameter(torch.FloatTensor([0.001]))
    scale_param = jnp.array([0.001], dtype=jnp.float32)

    # 1) Small NCHW input (single-block, ungridded path).
    x_small = jax.random.normal(key, (2, 4, 16, 16), dtype=jnp.float32)
    y_small = jax.block_until_ready(scale_forward(x_small, scale_param))
    ref_small = x_small * scale_param[0]
    assert y_small.shape == x_small.shape and y_small.dtype == x_small.dtype
    assert jnp.allclose(y_small, ref_small, rtol=1e-6, atol=1e-6)

    # 2) Larger input (gridded, lane-dense path; no pad/slice since total % 128 == 0).
    x_big = jax.random.normal(jax.random.PRNGKey(1), (8, 32, 56, 56), dtype=jnp.float32)
    y_big = jax.block_until_ready(scale_forward(x_big, scale_param))
    ref_big = x_big * scale_param[0]
    assert y_big.shape == x_big.shape and y_big.dtype == x_big.dtype
    assert jnp.allclose(y_big, ref_big, rtol=1e-6, atol=1e-6)

    # 3) Ragged-grid check at small size: force the gridded path with a block size
    #    (256 rows) that does not divide rows (400) -> masked last block.
    x_rag = jax.random.normal(jax.random.PRNGKey(2), (1, 4, 100, 128), dtype=jnp.float32)
    y_rag = jax.block_until_ready(
        scale_forward(x_rag, scale_param, grid_threshold_bytes=0, block_rows=256))
    ref_rag = x_rag * scale_param[0]
    assert jnp.allclose(y_rag, ref_rag, rtol=1e-6, atol=1e-6)

    # 4) Non-128-divisible element count (lane-remainder pad path).
    x_odd = jax.random.normal(jax.random.PRNGKey(3), (3, 5, 7, 11), dtype=jnp.float32)
    y_odd = jax.block_until_ready(scale_forward(x_odd, scale_param))
    ref_odd = x_odd * scale_param[0]
    assert y_odd.shape == x_odd.shape
    assert jnp.allclose(y_odd, ref_odd, rtol=1e-6, atol=1e-6)

    # 5) bf16 input: PyTorch promotion semantics -> f32 output.
    x_bf16 = jax.random.normal(jax.random.PRNGKey(4), (2, 4, 16, 16), dtype=jnp.bfloat16)
    y_bf16 = jax.block_until_ready(scale_forward(x_bf16, scale_param))
    ref_bf16 = x_bf16.astype(jnp.float32) * scale_param[0]
    assert y_bf16.dtype == jnp.float32
    assert jnp.allclose(y_bf16, ref_bf16, rtol=1e-6, atol=1e-6)

    print("KERNEL_OK")
</pallas_src>

<mosaic_0001>
module attributes {stable_mosaic.version = 11 : i64} {
  func.func @_scale_kernel(%arg0: memref<1x1xf32, #tpu.memory_space<smem>>, %arg1: memref<16x128xf32, #tpu.memory_space<vmem>>, %arg2: memref<16x128xf32, #tpu.memory_space<vmem>>) attributes {dimension_semantics = [], scalar_prefetch = 0 : i64, scratch_operands = 0 : i64, tpu.core_type = #tpu.core_type<tc>} {
    %c0 = arith.constant 0 : index
    %c0_0 = arith.constant 0 : index
    %0 = memref.load %arg0[%c0, %c0_0] : memref<1x1xf32, #tpu.memory_space<smem>>
    %c0_1 = arith.constant 0 : index
    %c0_2 = arith.constant 0 : index
    %1 = vector.load %arg1[%c0_1, %c0_2] : memref<16x128xf32, #tpu.memory_space<vmem>>, vector<16x128xf32>
    %2 = vector.broadcast %0 : f32 to vector<16x128xf32>
    %3 = arith.mulf %1, %2 : vector<16x128xf32>
    %c0_3 = arith.constant 0 : index
    %c0_4 = arith.constant 0 : index
    %4 = vector.load %arg2[%c0_3, %c0_4] : memref<16x128xf32, #tpu.memory_space<vmem>>, vector<16x128xf32>
    tpu.vector_store %arg2[%c0_3, %c0_4], %3 {strides = array<i32>} : memref<16x128xf32, #tpu.memory_space<vmem>>, vector<16x128xf32>,
    return
  }
}

</mosaic_0001>

<llo_original>
// kernel: tpu_custom_call.1
$region0: #{tpu_custom_call.1}
  #allocation0 [shape = 'u32[]', space=smem, size = 0x4, offset = 0x4, fixed_abs, tag = 'smem constant byte address 0x4 - core index']
  #allocation1 [shape = 'u32[144,128]{1,0:T(1,128)}', space=vmem, size = 0x12000, scoped, tag = 'internal scratch']
  #allocation2 [shape = 'f32[1,1]{1,0:T(1,128)S(6)}', space=smem, size = 0x200, scoped, tag = 'scoped memory for tpu_custom_call.1']
  %s0 = inlined_call_operand.<no memory space> [shape: f32[1,1], index: 0, kind: input, shape index: {}]
  %s1 = inlined_call_operand.hbm [shape: f32[16,128], index: 1, kind: input, shape index: {}]
  %s2 = inlined_call_operand.hbm [shape: f32[16,128], index: 2, kind: output, shape index: {}]
  %s3 = sld [smem:[#allocation0]]
  $region22: #{tpu_custom_call.1} parent=0
    _
  %s5 = ssub.s32 1, %s3
  %s6 = scalar_select 0, %s5, %s3
  %7 = sst [smem:[#allocation2]] %s0
  $region1: #{tpu_custom_call.1} parent=0
    #allocation3 [shape = 'u8[8192]{0}', space=vmem, size = 0x2000, scoped, tag = 'input window, operand 1, single buffered']
    #allocation4 [shape = 's32[1]{0}', space=sflag, size = 0x4, scoped, tag = 'scoped memory for tpu_custom_call.1']
    #allocation5 [shape = 's32[1]{0}', space=sflag, size = 0x4, scoped, tag = 'scoped memory for tpu_custom_call.1']
    #allocation6 [shape = 'u8[8192]{0}', space=vmem, size = 0x2000, scoped, tag = 'output window, operand 0, single buffered']
    %8 = vsyncpa [#allocation4], 0
    %9 = vsyncpa [#allocation5], 0
    // Predicated region
    $region2: #{tpu_custom_call.1} parent=1 // pred_check
      _
    $region3: #{tpu_custom_call.1} parent=1 // pred_check_branch
      %11 = sbr.rel (0) target = $region5
    $region4: #{tpu_custom_call.1} parent=1 // pred_region
      _
    $region5: #{tpu_custom_call.1} parent=1 // pred_fallthru
      _
    // Predicated region
    $region6: #{tpu_custom_call.1} parent=1 // pred_check
      _
    $region7: #{tpu_custom_call.1} parent=1 // pred_check_branch
      %13 = sbr.rel (0) target = $region9
    $region8: #{tpu_custom_call.1} parent=1 // pred_region
      %s15 = ssub.s32 256, 256
      %16 = vsyncadd [#allocation4], %s15
      %s17 = sshll.u32 [#allocation3], 4
      %s18 = int_to_ptr.vmem [resolvable:$true] %s17
      %23 = dma.hbm_to_vmem [thread:$0]  %s1, 256, %s18, [#allocation4], 128, 128, 8
    $region9: #{tpu_custom_call.1} parent=1 // pred_fallthru
      _
    // Predicated region
    $region10: #{tpu_custom_call.1} parent=1 // pred_check
      _
    $region11: #{tpu_custom_call.1} parent=1 // pred_check_branch
      %25 = sbr.rel (0) target = $region13
    $region12: #{tpu_custom_call.1} parent=1 // pred_region
      %26 = dma.done [#allocation4], 256
    $region13: #{tpu_custom_call.1} parent=1 // pred_fallthru
      _
    %s27 = sld [smem:[#allocation2]]
    %v28 = vld [vmem:[#allocation3] sm:$0xff]
    %v29 = vld [vmem:[#allocation3 + $0x8] sm:$0xff]
    %v30 = vstv %s27
    %v31 = vmul.f32 %v28, %v30
    %v32 = vmul.f32 %v29, %v30
    %33 = vst [vmem:[#allocation6] sm:$0xff] %v31
    %34 = vst [vmem:[#allocation6 + $0x8] sm:$0xff] %v32
    // Predicated region
    $region14: #{tpu_custom_call.1} parent=1 // pred_check
      _
    $region15: #{tpu_custom_call.1} parent=1 // pred_check_branch
      %36 = sbr.rel (0) target = $region17
    $region16: #{tpu_custom_call.1} parent=1 // pred_region
      %s38 = ssub.s32 256, 256
      %39 = vsyncadd [#allocation5], %s38
      %s40 = sshll.u32 [#allocation6], 4
      %s41 = int_to_ptr.vmem [resolvable:$true] %s40
      %46 = dma.vmem_to_hbm [thread:$0]  %s41, 256, %s2, [#allocation5], 128, 128, 8
    $region17: #{tpu_custom_call.1} parent=1 // pred_fallthru
      _
    // Predicated region
    $region18: #{tpu_custom_call.1} parent=1 // pred_check
      _
    $region19: #{tpu_custom_call.1} parent=1 // pred_check_branch
      %48 = sbr.rel (0) target = $region21
    $region20: #{tpu_custom_call.1} parent=1 // pred_region
      %49 = dma.done [#allocation5], 256
    $region21: #{tpu_custom_call.1} parent=1 // pred_fallthru
      _
    %50 = vsyncpa [#allocation4], 1
    %51 = vsyncpa [#allocation5], 1

</llo_original>
